<compile_context>
chip_gen: v7x
topology: tpu7x:2x2x1
jax: 0.10.0
libtpu: 0.0.40
codegen_flags: <defaults>
</compile_context>

<pallas_src>
import functools

import jax
import jax.numpy as jnp
from jax import lax
from jax.experimental import pallas as pl
from jax.experimental.pallas import tpu as pltpu

_LANE = 128


def _round_up(x, m):
    return ((x + m - 1) // m) * m


def _bias_layout(widths):
    """Lane-aligned (128) start offsets for the packed bias vector."""
    offsets = []
    off = 0
    for w in widths:
        offsets.append(off)
        off += _round_up(w, _LANE)
    return tuple(offsets), off


def _pick_row_tile(n_txt):
    """Largest of {512,256,128} rows that n_txt can fill; tiny batches round up to 8."""
    for t in (512, 256, 128):
        if n_txt >= t:
            return t
    return _round_up(max(n_txt, 8), 8)


def _mask_decoder_kernel(bias_offsets, bias_widths,
                         img_ref, txt_ref,
                         p1w_ref, p2w_ref, fc1w_ref, fc2w_ref,
                         bias_ref, out_ref):
    bf16 = jnp.bfloat16
    o1, o2, o3, o4 = bias_offsets
    w1, w2, w3, w4 = bias_widths

    # Static, lane-aligned slices of the packed bias (zero-cost ref views).
    p1b = bias_ref[:, o1:o1 + w1]      # (1, E)       f32
    p2b = bias_ref[:, o2:o2 + w2]      # (1, E)       f32
    fc1b = bias_ref[:, o3:o3 + w3]     # (1, S*S)     f32
    fc2b = bias_ref[:, o4:o4 + w4]     # (1, S*S*C)   f32

    img_b = img_ref[...]               # (N_img, D_img) bf16 (resident)
    txt_b = txt_ref[...]               # (Tr,    D_txt) bf16 (streamed)

    # proj1(image), proj2(text): bf16 x bf16 -> f32 accumulate on the MXU.
    proj_img = jnp.dot(img_b, p1w_ref[...],
                       preferred_element_type=jnp.float32) + p1b   # (N_img, E)
    proj_txt = jnp.dot(txt_b, p2w_ref[...],
                       preferred_element_type=jnp.float32) + p2b   # (Tr,   E)

    # attention_scores = proj2(text) @ proj1(image).T  -> (Tr, N_img)
    # Contract the feature axis of both operands directly (no XLU transpose).
    scores = lax.dot_general(proj_txt.astype(bf16), proj_img.astype(bf16),
                             (((1,), (1,)), ((), ())),
                             preferred_element_type=jnp.float32)

    # softmax over the N_img axis; reciprocal on the EUP slot.
    m = jnp.max(scores, axis=-1, keepdims=True)
    e = jnp.exp(scores - m)
    denom = jnp.sum(e, axis=-1, keepdims=True)
    weights = e * pl.reciprocal(denom, approx=True)

    # cross_attended_embedding = attention_weights @ image_embedding
    cross = jnp.dot(weights.astype(bf16), img_b,
                    preferred_element_type=jnp.float32)            # (Tr, D_img)

    # fc1 + ReLU
    h = jnp.dot(cross.astype(bf16), fc1w_ref[...],
                preferred_element_type=jnp.float32) + fc1b
    h = jnp.maximum(h, 0.0)                                        # (Tr, S*S)

    # fc2 + sigmoid (sigmoid in bf16: EUP bf16 path on v6e/v7x, output is bf16)
    o = jnp.dot(h.astype(bf16), fc2w_ref[...],
                preferred_element_type=jnp.float32) + fc2b         # (Tr, S*S*C)
    out_ref[...] = jax.nn.sigmoid(o.astype(bf16)).astype(out_ref.dtype)


@functools.partial(jax.jit, static_argnames=("side_len", "color_channels"))
def mask_decoder_forward(image_embedding, text_embedding, params,
                         *, side_len, color_channels):
    p1w, p2w, fc1w, fc2w, bias_packed = params
    bf16 = jnp.bfloat16

    n_img, d_img = image_embedding.shape
    n_txt, d_txt = text_embedding.shape
    emb_dim = p1w.shape[1]
    s2 = side_len * side_len
    out_dim = s2 * color_channels

    assert p1w.shape == (d_img, emb_dim)
    assert p2w.shape == (d_txt, emb_dim)
    assert fc1w.shape == (d_img, s2)
    assert fc2w.shape == (s2, out_dim)

    bias_widths = (emb_dim, emb_dim, s2, out_dim)
    bias_offsets, bias_total = _bias_layout(bias_widths)
    assert bias_packed.shape == (1, bias_total)

    # bf16 at the HBM boundary (no-ops if upstream already produces bf16).
    img = image_embedding.astype(bf16)
    txt = text_embedding.astype(bf16)
    p1w = p1w.astype(bf16)
    p2w = p2w.astype(bf16)
    fc1w = fc1w.astype(bf16)
    fc2w = fc2w.astype(bf16)
    bias_packed = bias_packed.astype(jnp.float32)   # biases stay f32 (tiny, post-accum)

    # Row tiling over N_txt: pad to a multiple of the tile (keeps the (8,128)
    # BlockSpec rule); weights stay resident via constant index_maps.
    row_tile = _pick_row_tile(n_txt)
    n_pad = _round_up(n_txt, row_tile)
    if n_pad != n_txt:
        txt = jnp.pad(txt, ((0, n_pad - n_txt), (0, 0)))
    grid = (n_pad // row_tile,)

    # VMEM guard: resident (double-buffered, conservative) + streamed blocks.
    def nbytes(a):
        return a.size * a.dtype.itemsize

    resident_bytes = 2 * (nbytes(img) + nbytes(p1w) + nbytes(p2w)
                          + nbytes(fc1w) + nbytes(fc2w) + nbytes(bias_packed))
    streamed_bytes = 2 * (row_tile * d_txt * 2 + row_tile * out_dim * 2)
    est = resident_bytes + streamed_bytes + (2 << 20)   # slack for internal scratch
    budget = 48 * (1 << 20)   # keep headroom under v7x's 64 MiB physical VMEM
    if est > budget:
        # TODO(synk): tile fc2's output columns on a second grid axis instead of
        # holding fc2w fully resident once side_len grows this large.
        raise ValueError(
            f"MaskDecoder resident working set (~{est >> 20} MiB) exceeds the "
            f"VMEM budget ({budget >> 20} MiB); fc2/fc1 weights need column tiling.")

    cp_kwargs = dict(dimension_semantics=("parallel",))
    if est > 16 * (1 << 20):   # raise scoped VMEM only when the default may not cover it
        cp_kwargs["vmem_limit_bytes"] = int(est)

    def resident_spec(arr):
        # Full array, same block every grid step -> loaded once, reused.
        return pl.BlockSpec(arr.shape, lambda i: (0, 0))

    kernel = functools.partial(_mask_decoder_kernel, bias_offsets, bias_widths)

    flat = pl.pallas_call(
        kernel,
        out_shape=jax.ShapeDtypeStruct((n_pad, out_dim), bf16),
        grid=grid,
        in_specs=[
            resident_spec(img),                                  # image_embedding
            pl.BlockSpec((row_tile, d_txt), lambda i: (i, 0)),   # text_embedding (streamed)
            resident_spec(p1w),
            resident_spec(p2w),
            resident_spec(fc1w),
            resident_spec(fc2w),
            resident_spec(bias_packed),
        ],
        out_specs=pl.BlockSpec((row_tile, out_dim), lambda i: (i, 0)),
        compiler_params=pltpu.CompilerParams(**cp_kwargs),
    )(img, txt, p1w, p2w, fc1w, fc2w, bias_packed)

    # PyTorch: out.reshape(-1, C, H, W) — NCHW.  Output stays bf16; upcast only
    # if the consumer truly needs f32.
    return flat[:n_txt].reshape(n_txt, color_channels, side_len, side_len)


def _init_params(key, image_dim, text_dim, emb_dim, side_len, color_channels):
    """Deterministic synthetic parameters (shapes per nn.Linear in __init__),
    stored pre-transposed as (in, out) in bf16; biases packed lane-aligned f32."""
    ks = jax.random.split(key, 8)
    s2 = side_len * side_len
    out_dim = s2 * color_channels

    def lin(kw, kb, fan_in, fan_out):
        w = jax.random.normal(kw, (fan_in, fan_out), jnp.float32) * (1.0 / jnp.sqrt(fan_in))
        b = jax.random.normal(kb, (fan_out,), jnp.float32) * 0.01
        return w.astype(jnp.bfloat16), b

    p1w, p1b = lin(ks[0], ks[1], image_dim, emb_dim)
    p2w, p2b = lin(ks[2], ks[3], text_dim, emb_dim)
    fc1w, fc1b = lin(ks[4], ks[5], image_dim, s2)
    fc2w, fc2b = lin(ks[6], ks[7], s2, out_dim)

    widths = (emb_dim, emb_dim, s2, out_dim)
    offsets, total = _bias_layout(widths)
    packed = jnp.zeros((1, total), jnp.float32)
    for b, off in zip((p1b, p2b, fc1b, fc2b), offsets):
        packed = packed.at[0, off:off + b.shape[0]].set(b)

    params = (p1w, p2w, fc1w, fc2w, packed)
    raw_biases = (p1b, p2b, fc1b, fc2b)
    return params, raw_biases


def _reference(image_embedding, text_embedding, weights, biases, side_len, color_channels):
    """Pure-JAX reference mirroring the kernel's bf16-input / f32-accumulate
    matmuls, but with exact softmax and f32 sigmoid (so the self-test measures
    kernel-vs-XLA, not weight quantization)."""
    p1w, p2w, fc1w, fc2w = weights
    p1b, p2b, fc1b, fc2b = biases
    bf = jnp.bfloat16
    img_b = image_embedding.astype(bf)
    txt_b = text_embedding.astype(bf)
    proj_img = jnp.dot(img_b, p1w, preferred_element_type=jnp.float32) + p1b
    proj_txt = jnp.dot(txt_b, p2w, preferred_element_type=jnp.float32) + p2b
    scores = lax.dot_general(proj_txt.astype(bf), proj_img.astype(bf),
                             (((1,), (1,)), ((), ())),
                             preferred_element_type=jnp.float32)
    w = jax.nn.softmax(scores, axis=-1)
    cross = jnp.dot(w.astype(bf), img_b, preferred_element_type=jnp.float32)
    h = jax.nn.relu(jnp.dot(cross.astype(bf), fc1w,
                            preferred_element_type=jnp.float32) + fc1b)
    o = jax.nn.sigmoid(jnp.dot(h.astype(bf), fc2w,
                               preferred_element_type=jnp.float32) + fc2b)
    return o.reshape(-1, color_channels, side_len, side_len)


if __name__ == "__main__":
    # Small shapes consistent with the module's forward:
    #   image_embedding: (N_img, image_embedding_dim)
    #   text_embedding : (N_txt, text_embedding_dim)
    IMAGE_DIM = 128
    TEXT_DIM = 128
    EMB_DIM = 128
    SIDE_LEN = 16
    COLOR_CHANNELS = 3

    key = jax.random.PRNGKey(0)
    k_img, k_txt, k_txt2, k_params = jax.random.split(key, 4)
    params, raw_biases = _init_params(k_params, IMAGE_DIM, TEXT_DIM, EMB_DIM,
                                      SIDE_LEN, COLOR_CHANNELS)
    weights = params[:4]

    # Tolerances cover: bf16 matmul operands, approx-reciprocal softmax,
    # bf16 sigmoid and bf16 output quantization (sigmoid outputs are in [0,1]).
    ATOL, RTOL = 3e-2, 3e-2

    # Case 1: toy batch (single grid step).
    N_IMG, N_TXT = 8, 8
    image_embedding = jax.random.normal(k_img, (N_IMG, IMAGE_DIM), jnp.float32)
    text_embedding = jax.random.normal(k_txt, (N_TXT, TEXT_DIM), jnp.float32)

    out = mask_decoder_forward(image_embedding, text_embedding, params,
                               side_len=SIDE_LEN, color_channels=COLOR_CHANNELS)
    out = jax.block_until_ready(out)
    assert out.shape == (N_TXT, COLOR_CHANNELS, SIDE_LEN, SIDE_LEN), out.shape
    ref = _reference(image_embedding, text_embedding, weights, raw_biases,
                     SIDE_LEN, COLOR_CHANNELS)
    assert jnp.allclose(out.astype(jnp.float32), ref, atol=ATOL, rtol=RTOL), \
        float(jnp.max(jnp.abs(out.astype(jnp.float32) - ref)))

    # Case 2: non-multiple row count -> padding + multi-step pipelined grid.
    N_TXT2 = 130
    text_embedding2 = jax.random.normal(k_txt2, (N_TXT2, TEXT_DIM), jnp.float32)
    out2 = mask_decoder_forward(image_embedding, text_embedding2, params,
                                side_len=SIDE_LEN, color_channels=COLOR_CHANNELS)
    out2 = jax.block_until_ready(out2)
    assert out2.shape == (N_TXT2, COLOR_CHANNELS, SIDE_LEN, SIDE_LEN), out2.shape
    ref2 = _reference(image_embedding, text_embedding2, weights, raw_biases,
                      SIDE_LEN, COLOR_CHANNELS)
    assert jnp.allclose(out2.astype(jnp.float32), ref2, atol=ATOL, rtol=RTOL), \
        float(jnp.max(jnp.abs(out2.astype(jnp.float32) - ref2)))

    print("KERNEL_OK")
</pallas_src>

<mosaic_0001>
module attributes {stable_mosaic.version = 11 : i64} {
  func.func @_mask_decoder_kernel(%arg0: i32, %arg1: memref<8x128xbf16, #tpu.memory_space<vmem>>, %arg2: memref<8x128xbf16, #tpu.memory_space<vmem>>, %arg3: memref<128x128xbf16, #tpu.memory_space<vmem>>, %arg4: memref<128x128xbf16, #tpu.memory_space<vmem>>, %arg5: memref<128x256xbf16, #tpu.memory_space<vmem>>, %arg6: memref<256x768xbf16, #tpu.memory_space<vmem>>, %arg7: memref<1x1280xf32, #tpu.memory_space<vmem>>, %arg8: memref<8x768xbf16, #tpu.memory_space<vmem>>) attributes {dimension_semantics = [#tpu.dimension_semantics<parallel>], iteration_bounds = array<i64: 1>, scalar_prefetch = 0 : i64, scratch_operands = 0 : i64, tpu.core_type = #tpu.core_type<tc>, window_params = [{pipeline_mode = #tpu.pipeline_mode<synchronous>, transform_indices = @transform_0, window_bounds = array<i64: 8, 128>}, {transform_indices = @transform_1, window_bounds = array<i64: 8, 128>}, {pipeline_mode = #tpu.pipeline_mode<synchronous>, transform_indices = @transform_2, window_bounds = array<i64: 128, 128>}, {pipeline_mode = #tpu.pipeline_mode<synchronous>, transform_indices = @transform_3, window_bounds = array<i64: 128, 128>}, {pipeline_mode = #tpu.pipeline_mode<synchronous>, transform_indices = @transform_4, window_bounds = array<i64: 128, 256>}, {pipeline_mode = #tpu.pipeline_mode<synchronous>, transform_indices = @transform_5, window_bounds = array<i64: 256, 768>}, {pipeline_mode = #tpu.pipeline_mode<synchronous>, transform_indices = @transform_6, window_bounds = array<i64: 1, 1280>}, {transform_indices = @transform_7, window_bounds = array<i64: 8, 768>}]} {
    %c0 = arith.constant 0 : index
    %c0_0 = arith.constant 0 : index
    %0 = vector.load %arg7[%c0, %c0_0] : memref<1x1280xf32, #tpu.memory_space<vmem>>, vector<1x128xf32>
    %c0_1 = arith.constant 0 : index
    %c128 = arith.constant 128 : index
    %1 = vector.load %arg7[%c0_1, %c128] : memref<1x1280xf32, #tpu.memory_space<vmem>>, vector<1x128xf32>
    %c0_2 = arith.constant 0 : index
    %c256 = arith.constant 256 : index
    %2 = vector.load %arg7[%c0_2, %c256] : memref<1x1280xf32, #tpu.memory_space<vmem>>, vector<1x256xf32>
    %c0_3 = arith.constant 0 : index
    %c512 = arith.constant 512 : index
    %3 = vector.load %arg7[%c0_3, %c512] : memref<1x1280xf32, #tpu.memory_space<vmem>>, vector<1x768xf32>
    %c0_4 = arith.constant 0 : index
    %c0_5 = arith.constant 0 : index
    %4 = vector.load %arg1[%c0_4, %c0_5] : memref<8x128xbf16, #tpu.memory_space<vmem>>, vector<8x128xbf16>
    %c0_6 = arith.constant 0 : index
    %c0_7 = arith.constant 0 : index
    %5 = vector.load %arg2[%c0_6, %c0_7] : memref<8x128xbf16, #tpu.memory_space<vmem>>, vector<8x128xbf16>
    %c0_8 = arith.constant 0 : index
    %c0_9 = arith.constant 0 : index
    %6 = vector.load %arg3[%c0_8, %c0_9] : memref<128x128xbf16, #tpu.memory_space<vmem>>, vector<128x128xbf16>
    %cst = arith.constant dense<0.000000e+00> : vector<8x128xf32>
    %7 = tpu.matmul %4, %6, %cst {dimension_numbers = #tpu.dot_dimension_numbers<[1], [0], [0], [1], [0, 0, 1, 1], [], []>} : vector<8x128xbf16>, vector<128x128xbf16>, vector<8x128xf32> -> vector<8x128xf32>
    %8 = vector.broadcast %0 : vector<1x128xf32> to vector<8x128xf32>
    %9 = arith.addf %7, %8 : vector<8x128xf32>
    %c0_10 = arith.constant 0 : index
    %c0_11 = arith.constant 0 : index
    %10 = vector.load %arg4[%c0_10, %c0_11] : memref<128x128xbf16, #tpu.memory_space<vmem>>, vector<128x128xbf16>
    %cst_12 = arith.constant dense<0.000000e+00> : vector<8x128xf32>
    %11 = tpu.matmul %5, %10, %cst_12 {dimension_numbers = #tpu.dot_dimension_numbers<[1], [0], [0], [1], [0, 0, 1, 1], [], []>} : vector<8x128xbf16>, vector<128x128xbf16>, vector<8x128xf32> -> vector<8x128xf32>
    %12 = vector.broadcast %1 : vector<1x128xf32> to vector<8x128xf32>
    %13 = arith.addf %11, %12 : vector<8x128xf32>
    %14 = arith.truncf %13 : vector<8x128xf32> to vector<8x128xbf16>
    %15 = arith.truncf %9 : vector<8x128xf32> to vector<8x128xbf16>
    %cst_13 = arith.constant dense<0.000000e+00> : vector<8x8xf32>
    %16 = tpu.matmul %14, %15, %cst_13 {dimension_numbers = #tpu.dot_dimension_numbers<[1], [1], [0], [0], [0, 0, 1, 0], [], []>} : vector<8x128xbf16>, vector<8x128xbf16>, vector<8x8xf32> -> vector<8x8xf32>
    %cst_14 = arith.constant dense<0xFF800000> : vector<8xf32>
    %17 = vector.multi_reduction <maximumf>, %16, %cst_14 [1] : vector<8x8xf32> to vector<8xf32>
    %18 = vector.shape_cast %17 : vector<8xf32> to vector<8x1xf32>
    %19 = vector.broadcast %18 : vector<8x1xf32> to vector<8x8xf32>
    %20 = arith.subf %16, %19 : vector<8x8xf32>
    %21 = math.exp %20 : vector<8x8xf32>
    %cst_15 = arith.constant dense<0.000000e+00> : vector<8xf32>
    %22 = vector.multi_reduction <add>, %21, %cst_15 [1] : vector<8x8xf32> to vector<8xf32>
    %23 = vector.shape_cast %22 : vector<8xf32> to vector<8x1xf32>
    %24 = tpu.reciprocal %23 {approx = true} : vector<8x1xf32> -> vector<8x1xf32>
    %25 = vector.broadcast %24 : vector<8x1xf32> to vector<8x8xf32>
    %26 = arith.mulf %21, %25 : vector<8x8xf32>
    %27 = arith.truncf %26 : vector<8x8xf32> to vector<8x8xbf16>
    %cst_16 = arith.constant dense<0.000000e+00> : vector<8x128xf32>
    %28 = tpu.matmul %27, %4, %cst_16 {dimension_numbers = #tpu.dot_dimension_numbers<[1], [0], [0], [1], [0, 0, 1, 1], [], []>} : vector<8x8xbf16>, vector<8x128xbf16>, vector<8x128xf32> -> vector<8x128xf32>
    %29 = arith.truncf %28 : vector<8x128xf32> to vector<8x128xbf16>
    %c0_17 = arith.constant 0 : index
    %c0_18 = arith.constant 0 : index
    %30 = vector.load %arg5[%c0_17, %c0_18] : memref<128x256xbf16, #tpu.memory_space<vmem>>, vector<128x256xbf16>
    %cst_19 = arith.constant dense<0.000000e+00> : vector<8x256xf32>
    %31 = tpu.matmul %29, %30, %cst_19 {dimension_numbers = #tpu.dot_dimension_numbers<[1], [0], [0], [1], [0, 0, 1, 1], [], []>} : vector<8x128xbf16>, vector<128x256xbf16>, vector<8x256xf32> -> vector<8x256xf32>
    %32 = vector.broadcast %2 : vector<1x256xf32> to vector<8x256xf32>
    %33 = arith.addf %31, %32 : vector<8x256xf32>
    %cst_20 = arith.constant 0.000000e+00 : f32
    %34 = vector.broadcast %cst_20 : f32 to vector<8x256xf32>
    %35 = arith.maximumf %33, %34 : vector<8x256xf32>
    %36 = arith.truncf %35 : vector<8x256xf32> to vector<8x256xbf16>
    %c0_21 = arith.constant 0 : index
    %c0_22 = arith.constant 0 : index
    %37 = vector.load %arg6[%c0_21, %c0_22] : memref<256x768xbf16, #tpu.memory_space<vmem>>, vector<256x768xbf16>
    %cst_23 = arith.constant dense<0.000000e+00> : vector<8x768xf32>
    %38 = tpu.matmul %36, %37, %cst_23 {dimension_numbers = #tpu.dot_dimension_numbers<[1], [0], [0], [1], [0, 0, 1, 1], [], []>} : vector<8x256xbf16>, vector<256x768xbf16>, vector<8x768xf32> -> vector<8x768xf32>
    %39 = vector.broadcast %3 : vector<1x768xf32> to vector<8x768xf32>
    %40 = arith.addf %38, %39 : vector<8x768xf32>
    %41 = arith.truncf %40 : vector<8x768xf32> to vector<8x768xbf16>
    %42 = arith.negf %41 : vector<8x768xbf16>
    %43 = math.exp %42 : vector<8x768xbf16>
    %cst_24 = arith.constant 1.000000e+00 : bf16
    %44 = vector.broadcast %cst_24 : bf16 to vector<8x768xbf16>
    %45 = arith.addf %44, %43 : vector<8x768xbf16>
    %46 = arith.divf %44, %45 : vector<8x768xbf16>
    %c0_25 = arith.constant 0 : index
    %c0_26 = arith.constant 0 : index
    %47 = vector.load %arg8[%c0_25, %c0_26] : memref<8x768xbf16, #tpu.memory_space<vmem>>, vector<8x768xbf16>
    tpu.vector_store %arg8[%c0_25, %c0_26], %46 {strides = array<i32>} : memref<8x768xbf16, #tpu.memory_space<vmem>>, vector<8x768xbf16>,
    return
  }
  func.func @transform_0(%arg0: i32) -> (i32, i32) {
    %c0_i32 = arith.constant 0 : i32
    %c0_i32_0 = arith.constant 0 : i32
    %c0_i32_1 = arith.constant 0 : i32
    return %c0_i32, %c0_i32_0 : i32, i32
  }
  func.func @transform_1(%arg0: i32) -> (i32, i32) {
    %c0_i32 = arith.constant 0 : i32
    %c0_i32_0 = arith.constant 0 : i32
    return %arg0, %c0_i32 : i32, i32
  }
  func.func @transform_2(%arg0: i32) -> (i32, i32) {
    %c0_i32 = arith.constant 0 : i32
    %c0_i32_0 = arith.constant 0 : i32
    %c0_i32_1 = arith.constant 0 : i32
    return %c0_i32, %c0_i32_0 : i32, i32
  }
  func.func @transform_3(%arg0: i32) -> (i32, i32) {
    %c0_i32 = arith.constant 0 : i32
    %c0_i32_0 = arith.constant 0 : i32
    %c0_i32_1 = arith.constant 0 : i32
    return %c0_i32, %c0_i32_0 : i32, i32
  }
  func.func @transform_4(%arg0: i32) -> (i32, i32) {
    %c0_i32 = arith.constant 0 : i32
    %c0_i32_0 = arith.constant 0 : i32
    %c0_i32_1 = arith.constant 0 : i32
    return %c0_i32, %c0_i32_0 : i32, i32
  }
  func.func @transform_5(%arg0: i32) -> (i32, i32) {
    %c0_i32 = arith.constant 0 : i32
    %c0_i32_0 = arith.constant 0 : i32
    %c0_i32_1 = arith.constant 0 : i32
    return %c0_i32, %c0_i32_0 : i32, i32
  }
  func.func @transform_6(%arg0: i32) -> (i32, i32) {
    %c0_i32 = arith.constant 0 : i32
    %c0_i32_0 = arith.constant 0 : i32
    %c0_i32_1 = arith.constant 0 : i32
    return %c0_i32, %c0_i32_0 : i32, i32
  }
  func.func @transform_7(%arg0: i32) -> (i32, i32) {
    %c0_i32 = arith.constant 0 : i32
    %c0_i32_0 = arith.constant 0 : i32
    return %arg0, %c0_i32 : i32, i32
  }
}

</mosaic_0001>

<llo_original>
// kernel: mask_decoder_forward.1
$region0: #{mask_decoder_forward.1}
  #allocation0 [shape = 'u32[]', space=smem, size = 0x4, offset = 0x4, fixed_abs, tag = 'smem constant byte address 0x4 - core index']
  #allocation1 [shape = 'u32[144,128]{1,0:T(1,128)}', space=vmem, size = 0x12000, scoped, tag = 'internal scratch']
  %s0 = inlined_call_operand.vmem [shape: bf16[8,128], index: 0, kind: input, shape index: {}]
  %s1 = inlined_call_operand.vmem [shape: bf16[8,128], index: 1, kind: input, shape index: {}]
  %s2 = inlined_call_operand.hbm [shape: bf16[128,128], index: 2, kind: input, shape index: {}]
  %s3 = inlined_call_operand.hbm [shape: bf16[128,128], index: 3, kind: input, shape index: {}]
  %s4 = inlined_call_operand.hbm [shape: bf16[128,256], index: 4, kind: input, shape index: {}]
  %s5 = inlined_call_operand.hbm [shape: bf16[256,768], index: 5, kind: input, shape index: {}]
  %s6 = inlined_call_operand.vmem [shape: f32[1,1280], index: 6, kind: input, shape index: {}]
  %s7 = inlined_call_operand.vmem [shape: bf16[8,768], index: 7, kind: output, shape index: {}]
  %s8 = sld [smem:[#allocation0]]
  $region54: #{mask_decoder_forward.1} parent=0
    _
  %s10 = ssub.s32 1, %s8
  %s11 = scalar_select 0, %s10, %s8
  $region1: #{mask_decoder_forward.1} parent=0
    #allocation2 [shape = 'u8[32768]{0}', space=vmem, size = 0x8000, scoped, tag = 'input window, operand 2, single buffered']
    #allocation3 [shape = 's32[1]{0}', space=sflag, size = 0x4, scoped, tag = 'scoped memory for mask_decoder_forward.1']
    #allocation4 [shape = 'u8[32768]{0}', space=vmem, size = 0x8000, scoped, tag = 'input window, operand 3, single buffered']
    #allocation5 [shape = 's32[1]{0}', space=sflag, size = 0x4, scoped, tag = 'scoped memory for mask_decoder_forward.1']
    #allocation6 [shape = 'u8[65536]{0}', space=vmem, size = 0x10000, scoped, tag = 'input window, operand 4, single buffered']
    #allocation7 [shape = 'u8[393216]{0}', space=vmem, size = 0x60000, scoped, tag = 'input window, operand 5, single buffered']
    #allocation8 [shape = 's32[1]{0}', space=sflag, size = 0x4, scoped, tag = 'scoped memory for mask_decoder_forward.1']
    %12 = vsyncpa [#allocation3], 0
    %13 = vsyncpa [#allocation5], 0
    %14 = vsyncpa [#allocation8], 0
    // Predicated region
    $region2: #{mask_decoder_forward.1} parent=1 // pred_check
      _
    $region3: #{mask_decoder_forward.1} parent=1 // pred_check_branch
      %16 = sbr.rel (0) target = $region5
    $region4: #{mask_decoder_forward.1} parent=1 // pred_region
      _
    $region5: #{mask_decoder_forward.1} parent=1 // pred_fallthru
      _
    // Predicated region
    $region6: #{mask_decoder_forward.1} parent=1 // pred_check
      _
    $region7: #{mask_decoder_forward.1} parent=1 // pred_check_branch
      %18 = sbr.rel (0) target = $region9
    $region8: #{mask_decoder_forward.1} parent=1 // pred_region
      _
    $region9: #{mask_decoder_forward.1} parent=1 // pred_fallthru
      _
    // Predicated region
    $region10: #{mask_decoder_forward.1} parent=1 // pred_check
      _
    $region11: #{mask_decoder_forward.1} parent=1 // pred_check_branch
      %20 = sbr.rel (0) target = $region13
    $region12: #{mask_decoder_forward.1} parent=1 // pred_region
      %s22 = ssub.s32 1024, 1024
      %23 = vsyncadd [#allocation3], %s22
      %s24 = sshll.u32 [#allocation2], 4
      %s25 = int_to_ptr.vmem [resolvable:$true] %s24
      %30 = dma.hbm_to_vmem [thread:$0]  %s2, 1024, %s25, [#allocation3], 64, 64, 4
    $region13: #{mask_decoder_forward.1} parent=1 // pred_fallthru
      _
    // Predicated region
    $region14: #{mask_decoder_forward.1} parent=1 // pred_check
      _
    $region15: #{mask_decoder_forward.1} parent=1 // pred_check_branch
      %32 = sbr.rel (0) target = $region17
    $region16: #{mask_decoder_forward.1} parent=1 // pred_region
      %s34 = ssub.s32 1024, 1024
      %35 = vsyncadd [#allocation5], %s34
      %s36 = sshll.u32 [#allocation4], 4
      %s37 = int_to_ptr.vmem [resolvable:$true] %s36
      %42 = dma.hbm_to_vmem [thread:$0]  %s3, 1024, %s37, [#allocation5], 64, 64, 4
    $region17: #{mask_decoder_forward.1} parent=1 // pred_fallthru
      _
    // Predicated region
    $region18: #{mask_decoder_forward.1} parent=1 // pred_check
      _
    $region19: #{mask_decoder_forward.1} parent=1 // pred_check_branch
      %44 = sbr.rel (0) target = $region21
    $region20: #{mask_decoder_forward.1} parent=1 // pred_region
      %s46 = ssub.s32 2048, 2048
      %47 = vsyncadd [#allocation5], %s46
      %s48 = sshll.u32 [#allocation6], 4
      %s49 = int_to_ptr.vmem [resolvable:$true] %s48
      %54 = dma.hbm_to_vmem [thread:$0]  %s4, 2048, %s49, [#allocation5], 128, 128, 8
    $region21: #{mask_decoder_forward.1} parent=1 // pred_fallthru
      _
    // Predicated region
    $region22: #{mask_decoder_forward.1} parent=1 // pred_check
      _
    $region23: #{mask_decoder_forward.1} parent=1 // pred_check_branch
      %56 = sbr.rel (0) target = $region25
    $region24: #{mask_decoder_forward.1} parent=1 // pred_region
      %s58 = ssub.s32 12288, 12288
      %59 = vsyncadd [#allocation8], %s58
      %s60 = sshll.u32 [#allocation7], 4
      %s61 = int_to_ptr.vmem [resolvable:$true] %s60
      %66 = dma.hbm_to_vmem [thread:$0]  %s5, 12288, %s61, [#allocation8], 384, 384, 24
    $region25: #{mask_decoder_forward.1} parent=1 // pred_fallthru
      _
    // Predicated region
    $region26: #{mask_decoder_forward.1} parent=1 // pred_check
      _
    $region27: #{mask_decoder_forward.1} parent=1 // pred_check_branch
      %68 = sbr.rel (0) target = $region29
    $region28: #{mask_decoder_forward.1} parent=1 // pred_region
      _
    $region29: #{mask_decoder_forward.1} parent=1 // pred_fallthru
      _
    // Predicated region
    $region30: #{mask_decoder_forward.1} parent=1 // pred_check
      _
    $region31: #{mask_decoder_forward.1} parent=1 // pred_check_branch
      %70 = sbr.rel (0) target = $region33
    $region32: #{mask_decoder_forward.1} parent=1 // pred_region
      %71 = dma.done [#allocation3], 1024
    $region33: #{mask_decoder_forward.1} parent=1 // pred_fallthru
      _
    // Predicated region
    $region34: #{mask_decoder_forward.1} parent=1 // pred_check
      _
    $region35: #{mask_decoder_forward.1} parent=1 // pred_check_branch
      %73 = sbr.rel (0) target = $region37
    $region36: #{mask_decoder_forward.1} parent=1 // pred_region
      %74 = dma.done [#allocation5], 1024
    $region37: #{mask_decoder_forward.1} parent=1 // pred_fallthru
      _
    // Predicated region
    $region38: #{mask_decoder_forward.1} parent=1 // pred_check
      _
    $region39: #{mask_decoder_forward.1} parent=1 // pred_check_branch
      %76 = sbr.rel (0) target = $region41
    $region40: #{mask_decoder_forward.1} parent=1 // pred_region
      %77 = dma.done [#allocation5], 2048
    $region41: #{mask_decoder_forward.1} parent=1 // pred_fallthru
      _
    // Predicated region
    $region42: #{mask_decoder_forward.1} parent=1 // pred_check
      _
    $region43: #{mask_decoder_forward.1} parent=1 // pred_check_branch
      %79 = sbr.rel (0) target = $region45
    $region44: #{mask_decoder_forward.1} parent=1 // pred_region
      %80 = dma.done [#allocation8], 12288
    $region45: #{mask_decoder_forward.1} parent=1 // pred_fallthru
      _
    %v83 = vld [vmem:[%s6] sm:$0x1]
    %v84 = vld [vmem:[%s6 + $0x1] sm:$0x1]
    %v85 = vld [vmem:[%s6 + $0x2] sm:$0x3]
    %v86 = vld [vmem:[%s6 + $0x4] sm:$0x3f]
    %v87 = vld [vmem:[%s0] sm:$0xf]
    %v88 = vld [vmem:[%s1] sm:$0xf]
    %v89 = vld [vmem:[#allocation2] sm:$0xf]
    %v90 = vld [vmem:[#allocation2 + $0x4] sm:$0xf]
    %v91 = vld [vmem:[#allocation2 + $0x8] sm:$0xf]
    %v92 = vld [vmem:[#allocation2 + $0xc] sm:$0xf]
    %v93 = vld [vmem:[#allocation2 + $0x10] sm:$0xf]
    %v94 = vld [vmem:[#allocation2 + $0x14] sm:$0xf]
    %v95 = vld [vmem:[#allocation2 + $0x18] sm:$0xf]
    %v96 = vld [vmem:[#allocation2 + $0x1c] sm:$0xf]
    %v97 = vld [vmem:[#allocation2 + $0x20] sm:$0xf]
    %v98 = vld [vmem:[#allocation2 + $0x24] sm:$0xf]
    %v99 = vld [vmem:[#allocation2 + $0x28] sm:$0xf]
    %v100 = vld [vmem:[#allocation2 + $0x2c] sm:$0xf]
    %v101 = vld [vmem:[#allocation2 + $0x30] sm:$0xf]
    %v102 = vld [vmem:[#allocation2 + $0x34] sm:$0xf]
    %v103 = vld [vmem:[#allocation2 + $0x38] sm:$0xf]
    %v104 = vld [vmem:[#allocation2 + $0x3c] sm:$0xf]
    %v106 = vlaneseq
    %v107 = vshrl.u32 %v106, 7
    %v108 = vsub.s32 0, %v107
    %v109 = vrot.slane %v83, %v108
    %v127 = vunpack.c.l.b16 %v89
    %v128 = vunpack.c.l.b16 %v90
    %v129 = vunpack.c.l.b16 %v91
    %v130 = vunpack.c.l.b16 %v92
    %v131 = vunpack.c.l.b16 %v93
    %v132 = vunpack.c.l.b16 %v94
    %v133 = vunpack.c.l.b16 %v95
    %v134 = vunpack.c.l.b16 %v96
    %v135 = vunpack.c.l.b16 %v97
    %v136 = vunpack.c.l.b16 %v98
    %v137 = vunpack.c.l.b16 %v99
    %v138 = vunpack.c.l.b16 %v100
    %v139 = vunpack.c.l.b16 %v101
    %v140 = vunpack.c.l.b16 %v102
    %v141 = vunpack.c.l.b16 %v103
    %v142 = vunpack.c.l.b16 %v104
    %v143 = vpack.c.b16 %v128, %v127
    %v144 = vpack.c.b16 %v130, %v129
    %v145 = vpack.c.b16 %v132, %v131
    %v146 = vpack.c.b16 %v134, %v133
    %v147 = vpack.c.b16 %v136, %v135
    %v148 = vpack.c.b16 %v138, %v137
    %v149 = vpack.c.b16 %v140, %v139
    %v150 = vpack.c.b16 %v142, %v141
    %159 = vmatprep.subr.bf16.mxu0 0
    %160 = vmatpush1.bf16.msra.mxu0 %v143
    %161 = vmatprep.subr.bf16.mxu0 0
    %162 = vmatpush1.bf16.msra.mxu0 %v144
    %163 = vmatprep.subr.bf16.mxu0 0
    %164 = vmatpush1.bf16.msra.mxu0 %v145
    %165 = vmatprep.subr.bf16.mxu0 0
    %166 = vmatpush1.bf16.msra.mxu0 %v146
    %167 = vmatprep.subr.bf16.mxu0 0
    %168 = vmatpush1.bf16.msra.mxu0 %v147
    %169 = vmatprep.subr.bf16.mxu0 0
    %170 = vmatpush1.bf16.msra.mxu0 %v148
    %171 = vmatprep.subr.bf16.mxu0 0
    %172 = vmatpush1.bf16.msra.mxu0 %v149
    %173 = vmatprep.subr.bf16.mxu0 0
    %174 = vmatpush1.bf16.msra.mxu0 %v150
    %175 = vmatprep.subr.bf16.mxu0 0
    %176 = vmatpush1.bf16.msra.mxu0 0
    %177 = vmatprep.subr.bf16.mxu0 0
    %178 = vmatpush1.bf16.msra.mxu0 0
    %179 = vmatprep.subr.bf16.mxu0 0
    %180 = vmatpush1.bf16.msra.mxu0 0
    %181 = vmatprep.subr.bf16.mxu0 0
    %182 = vmatpush1.bf16.msra.mxu0 0
    %183 = vmatprep.subr.bf16.mxu0 0
    %184 = vmatpush1.bf16.msra.mxu0 0
    %185 = vmatprep.subr.bf16.mxu0 0
    %186 = vmatpush1.bf16.msra.mxu0 0
    %187 = vmatprep.subr.bf16.mxu0 0
    %188 = vmatpush1.bf16.msra.mxu0 0
    %189 = vmatprep.subr.bf16.mxu0 0
    %190 = vmatpush1.bf16.msra.mxu0 0
    %191 = vmatprep.mubr.bf16.mxu0 0
    %192 = vmatmul.mubr.bf16.gmra.mrb[0].mxu0 %v87
    %v193 = vpop.f32.mrb[0].mxu0
    %v194 = vadd.f32 %v109, %v193
    %v195 = vpop.f32.mrb[0].mxu0
    %v196 = vpop.f32.mrb[0].mxu0
    %v197 = vpop.f32.mrb[0].mxu0
    %198 = vdwg.mxu0
    %v199 = vld [vmem:[#allocation4] sm:$0xf]
    %v200 = vld [vmem:[#allocation4 + $0x4] sm:$0xf]
    %v201 = vld [vmem:[#allocation4 + $0x8] sm:$0xf]
    %v202 = vld [vmem:[#allocation4 + $0xc] sm:$0xf]
    %v203 = vld [vmem:[#allocation4 + $0x10] sm:$0xf]
    %v204 = vld [vmem:[#allocation4 + $0x14] sm:$0xf]
    %v205 = vld [vmem:[#allocation4 + $0x18] sm:$0xf]
    %v206 = vld [vmem:[#allocation4 + $0x1c] sm:$0xf]
    %v207 = vld [vmem:[#allocation4 + $0x20] sm:$0xf]
    %v208 = vld [vmem:[#allocation4 + $0x24] sm:$0xf]
    %v209 = vld [vmem:[#allocation4 + $0x28] sm:$0xf]
    %v210 = vld [vmem:[#allocation4 + $0x2c] sm:$0xf]
    %v211 = vld [vmem:[#allocation4 + $0x30] sm:$0xf]
    %v212 = vld [vmem:[#allocation4 + $0x34] sm:$0xf]
    %v213 = vld [vmem:[#allocation4 + $0x38] sm:$0xf]
    %v214 = vld [vmem:[#allocation4 + $0x3c] sm:$0xf]
    %v216 = vlaneseq
    %v217 = vshrl.u32 %v216, 7
    %v218 = vsub.s32 0, %v217
    %v219 = vrot.slane %v84, %v218
    %v237 = vunpack.c.l.b16 %v199
    %v238 = vunpack.c.l.b16 %v200
    %v239 = vunpack.c.l.b16 %v201
    %v240 = vunpack.c.l.b16 %v202
    %v241 = vunpack.c.l.b16 %v203
    %v242 = vunpack.c.l.b16 %v204
    %v243 = vunpack.c.l.b16 %v205
    %v244 = vunpack.c.l.b16 %v206
    %v245 = vunpack.c.l.b16 %v207
    %v246 = vunpack.c.l.b16 %v208
    %v247 = vunpack.c.l.b16 %v209
    %v248 = vunpack.c.l.b16 %v210
    %v249 = vunpack.c.l.b16 %v211
    %v250 = vunpack.c.l.b16 %v212
    %v251 = vunpack.c.l.b16 %v213
    %v252 = vunpack.c.l.b16 %v214
    %v253 = vpack.c.b16 %v238, %v237
    %v254 = vpack.c.b16 %v240, %v239
    %v255 = vpack.c.b16 %v242, %v241
    %v256 = vpack.c.b16 %v244, %v243
    %v257 = vpack.c.b16 %v246, %v245
    %v258 = vpack.c.b16 %v248, %v247
    %v259 = vpack.c.b16 %v250, %v249
    %v260 = vpack.c.b16 %v252, %v251
    %269 = vmatprep.subr.bf16.mxu0 0
    %270 = vmatpush1.bf16.msra.mxu0 %v253
    %271 = vmatprep.subr.bf16.mxu0 0
    %272 = vmatpush1.bf16.msra.mxu0 %v254
    %273 = vmatprep.subr.bf16.mxu0 0
    %274 = vmatpush1.bf16.msra.mxu0 %v255
    %275 = vmatprep.subr.bf16.mxu0 0
    %276 = vmatpush1.bf16.msra.mxu0 %v256
    %277 = vmatprep.subr.bf16.mxu0 0
    %278 = vmatpush1.bf16.msra.mxu0 %v257
    %279 = vmatprep.subr.bf16.mxu0 0
    %280 = vmatpush1.bf16.msra.mxu0 %v258
    %281 = vmatprep.subr.bf16.mxu0 0
    %282 = vmatpush1.bf16.msra.mxu0 %v259
    %283 = vmatprep.subr.bf16.mxu0 0
    %284 = vmatpush1.bf16.msra.mxu0 %v260
    %285 = vmatprep.subr.bf16.mxu0 0
    %286 = vmatpush1.bf16.msra.mxu0 0
    %287 = vmatprep.subr.bf16.mxu0 0
    %288 = vmatpush1.bf16.msra.mxu0 0
    %289 = vmatprep.subr.bf16.mxu0 0
    %290 = vmatpush1.bf16.msra.mxu0 0
    %291 = vmatprep.subr.bf16.mxu0 0
    %292 = vmatpush1.bf16.msra.mxu0 0
    %293 = vmatprep.subr.bf16.mxu0 0
    %294 = vmatpush1.bf16.msra.mxu0 0
    %295 = vmatprep.subr.bf16.mxu0 0
    %296 = vmatpush1.bf16.msra.mxu0 0
    %297 = vmatprep.subr.bf16.mxu0 0
    %298 = vmatpush1.bf16.msra.mxu0 0
    %299 = vmatprep.subr.bf16.mxu0 0
    %300 = vmatpush1.bf16.msra.mxu0 0
    %301 = vmatprep.mubr.bf16.mxu0 0
    %302 = vmatmul.mubr.bf16.gmra.mrb[0].mxu0 %v88
    %v303 = vpop.f32.mrb[0].mxu0
    %v304 = vadd.f32 %v219, %v303
    %v305 = vpop.f32.mrb[0].mxu0
    %v306 = vpop.f32.mrb[0].mxu0
    %v307 = vpop.f32.mrb[0].mxu0
    %308 = vdwg.mxu0
    %v309 = vpack.c.bf16 %v304, %v304
    %v310 = vpack.c.bf16 %v194, %v194
    %311 = vmatprep.subr.bf16.mxu0 0
    %312 = vmatpush1.bf16.xpose.msra.mxu0 %v310
    %313 = vmatprep.subr.bf16.mxu0 0
    %314 = vmatpush1.bf16.xpose.msra.mxu0 0
    %315 = vmatprep.subr.bf16.mxu0 0
    %316 = vmatpush1.bf16.xpose.msra.mxu0 0
    %317 = vmatprep.subr.bf16.mxu0 0
    %318 = vmatpush1.bf16.xpose.msra.mxu0 0
    %319 = vmatprep.subr.bf16.mxu0 0
    %320 = vmatpush1.bf16.xpose.msra.mxu0 0
    %321 = vmatprep.subr.bf16.mxu0 0
    %322 = vmatpush1.bf16.xpose.msra.mxu0 0
    %323 = vmatprep.subr.bf16.mxu0 0
    %324 = vmatpush1.bf16.xpose.msra.mxu0 0
    %325 = vmatprep.subr.bf16.mxu0 0
    %326 = vmatpush1.bf16.xpose.msra.mxu0 0
    %327 = vmatprep.subr.bf16.mxu0 0
    %328 = vmatpush1.bf16.xpose.msra.mxu0 0
    %329 = vmatprep.subr.bf16.mxu0 0
    %330 = vmatpush1.bf16.xpose.msra.mxu0 0
    %331 = vmatprep.subr.bf16.mxu0 0
    %332 = vmatpush1.bf16.xpose.msra.mxu0 0
    %333 = vmatprep.subr.bf16.mxu0 0
    %334 = vmatpush1.bf16.xpose.msra.mxu0 0
    %335 = vmatprep.subr.bf16.mxu0 0
    %336 = vmatpush1.bf16.xpose.msra.mxu0 0
    %337 = vmatprep.subr.bf16.mxu0 0
    %338 = vmatpush1.bf16.xpose.msra.mxu0 0
    %339 = vmatprep.subr.bf16.mxu0 0
    %340 = vmatpush1.bf16.xpose.msra.mxu0 0
    %341 = vmatprep.subr.bf16.mxu0 0
    %342 = vmatpush1.bf16.xpose.msra.mxu0 0
    %343 = vmatprep.mubr.bf16.mxu0 0
    %344 = vmatmul.mubr.bf16.gmra.mrb[0].mxu0 %v309
    %v345 = vpop.f32.mrb[0].mxu0
    %v346 = vadd.f32 0.0, %v345
    %v347 = vpop.f32.mrb[0].mxu0
    %v348 = vpop.f32.mrb[0].mxu0
    %v349 = vpop.f32.mrb[0].mxu0
    %350 = vdwg.mxu0
    %vm351 = vcmask 64512
    %v352 = vsel %vm351, %v346, -inf
    %353 = vmax.xlane.f32.xlu0 %v352
    %v354 = vpop.xlane.xlu0 %353
    %v355 = vsub.f32 %v346, %v354
    %v356 = vmul.f32 %v355, 1.442695
    %v357 = vpow.pop %v356
    %v358 = vsel %vm351, %v357, 0.0
    %359 = vadd.xlane.f32.xlu0 %v358
    %v360 = vpop.xlane.xlu0 %359
    %v361 = vrcp.pop %v360
    %v362 = vmul.f32 %v357, %v361
    %v363 = vpack.c.bf16 %v362, %v362
    %v365 = vsel %vm351, %v363, 0
    %vm367 = vcmask 1043456
    %v369 = vsel %vm367, %v87, 0
    %371 = vmatprep.subr.bf16.mxu0 0
    %372 = vmatpush1.bf16.msra.mxu0 %v369
    %373 = vmatprep.subr.bf16.mxu0 0
    %374 = vmatpush1.bf16.msra.mxu0 0
    %375 = vmatprep.subr.bf16.mxu0 0
    %376 = vmatpush1.bf16.msra.mxu0 0
    %377 = vmatprep.subr.bf16.mxu0 0
    %378 = vmatpush1.bf16.msra.mxu0 0
    %379 = vmatprep.subr.bf16.mxu0 0
    %380 = vmatpush1.bf16.msra.mxu0 0
    %381 = vmatprep.subr.bf16.mxu0 0
    %382 = vmatpush1.bf16.msra.mxu0 0
    %383 = vmatprep.subr.bf16.mxu0 0
    %384 = vmatpush1.bf16.msra.mxu0 0
    %385 = vmatprep.subr.bf16.mxu0 0
    %386 = vmatpush1.bf16.msra.mxu0 0
    %387 = vmatprep.subr.bf16.mxu0 0
    %388 = vmatpush1.bf16.msra.mxu0 0
    %389 = vmatprep.subr.bf16.mxu0 0
    %390 = vmatpush1.bf16.msra.mxu0 0
    %391 = vmatprep.subr.bf16.mxu0 0
    %392 = vmatpush1.bf16.msra.mxu0 0
    %393 = vmatprep.subr.bf16.mxu0 0
    %394 = vmatpush1.bf16.msra.mxu0 0
    %395 = vmatprep.subr.bf16.mxu0 0
    %396 = vmatpush1.bf16.msra.mxu0 0
    %397 = vmatprep.subr.bf16.mxu0 0
    %398 = vmatpush1.bf16.msra.mxu0 0
    %399 = vmatprep.subr.bf16.mxu0 0
    %400 = vmatpush1.bf16.msra.mxu0 0
    %401 = vmatprep.subr.bf16.mxu0 0
    %402 = vmatpush1.bf16.msra.mxu0 0
    %403 = vmatprep.mubr.bf16.mxu0 0
    %404 = vmatmul.mubr.bf16.gmra.mrb[0].mxu0 %v365
    %v405 = vpop.f32.mrb[0].mxu0
    %v406 = vadd.f32 0.0, %v405
    %v407 = vpop.f32.mrb[0].mxu0
    %v408 = vpop.f32.mrb[0].mxu0
    %v409 = vpop.f32.mrb[0].mxu0
    %410 = vdwg.mxu0
    %v411 = vpack.c.bf16 %v406, %v406
    %v412 = vld [vmem:[#allocation6] sm:$0xff]
    %v413 = vld [vmem:[#allocation6 + $0x8] sm:$0xff]
    %v414 = vld [vmem:[#allocation6 + $0x10] sm:$0xff]
    %v415 = vld [vmem:[#allocation6 + $0x18] sm:$0xff]
    %v416 = vld [vmem:[#allocation6 + $0x20] sm:$0xff]
    %v417 = vld [vmem:[#allocation6 + $0x28] sm:$0xff]
    %v418 = vld [vmem:[#allocation6 + $0x30] sm:$0xff]
    %v419 = vld [vmem:[#allocation6 + $0x38] sm:$0xff]
    %v420 = vld [vmem:[#allocation6 + $0x40] sm:$0xff]
    %v421 = vld [vmem:[#allocation6 + $0x48] sm:$0xff]
    %v422 = vld [vmem:[#allocation6 + $0x50] sm:$0xff]
    %v423 = vld [vmem:[#allocation6 + $0x58] sm:$0xff]
    %v424 = vld [vmem:[#allocation6 + $0x60] sm:$0xff]
    %v425 = vld [vmem:[#allocation6 + $0x68] sm:$0xff]
    %v426 = vld [vmem:[#allocation6 + $0x70] sm:$0xff]
    %v427 = vld [vmem:[#allocation6 + $0x78] sm:$0xff]
    %v429 = vlaneseq
    %v430 = vshrl.u32 %v429, 7
    %v431 = vsub.s32 0, %v430
    %v432 = vrot.slane %v85, %v431
    %v433 = vlaneseq
    %v434 = vshrl.u32 %v433, 7
    %v435 = vsub.s32 1, %v434
    %v436 = vrot.slane %v85, %v435
    %v455 = vunpack.c.l.b16 %v412
    %v456 = vunpack.c.h.b16 %v412
    %v457 = vunpack.c.l.b16 %v413
    %v458 = vunpack.c.h.b16 %v413
    %v459 = vunpack.c.l.b16 %v414
    %v460 = vunpack.c.h.b16 %v414
    %v461 = vunpack.c.l.b16 %v415
    %v462 = vunpack.c.h.b16 %v415
    %v463 = vunpack.c.l.b16 %v416
    %v464 = vunpack.c.h.b16 %v416
    %v465 = vunpack.c.l.b16 %v417
    %v466 = vunpack.c.h.b16 %v417
    %v467 = vunpack.c.l.b16 %v418
    %v468 = vunpack.c.h.b16 %v418
    %v469 = vunpack.c.l.b16 %v419
    %v470 = vunpack.c.h.b16 %v419
    %v471 = vunpack.c.l.b16 %v420
    %v472 = vunpack.c.h.b16 %v420
    %v473 = vunpack.c.l.b16 %v421
    %v474 = vunpack.c.h.b16 %v421
    %v475 = vunpack.c.l.b16 %v422
    %v476 = vunpack.c.h.b16 %v422
    %v477 = vunpack.c.l.b16 %v423
    %v478 = vunpack.c.h.b16 %v423
    %v479 = vunpack.c.l.b16 %v424
    %v480 = vunpack.c.h.b16 %v424
    %v481 = vunpack.c.l.b16 %v425
    %v482 = vunpack.c.h.b16 %v425
    %v483 = vunpack.c.l.b16 %v426
    %v484 = vunpack.c.h.b16 %v426
    %v485 = vunpack.c.l.b16 %v427
    %v486 = vunpack.c.h.b16 %v427
    %v487 = vpack.c.b16 %v457, %v455
    %v488 = vpack.c.b16 %v458, %v456
    %v489 = vpack.c.b16 %v461, %v459
    %v490 = vpack.c.b16 %v462, %v460
    %v491 = vpack.c.b16 %v465, %v463
    %v492 = vpack.c.b16 %v466, %v464
    %v493 = vpack.c.b16 %v469, %v467
    %v494 = vpack.c.b16 %v470, %v468
    %v495 = vpack.c.b16 %v473, %v471
    %v496 = vpack.c.b16 %v474, %v472
    %v497 = vpack.c.b16 %v477, %v475
    %v498 = vpack.c.b16 %v478, %v476
    %v499 = vpack.c.b16 %v481, %v479
    %v500 = vpack.c.b16 %v482, %v480
    %v501 = vpack.c.b16 %v485, %v483
    %v502 = vpack.c.b16 %v486, %v484
    %519 = vmatprep.subr.bf16.mxu0 %v488
    %520 = vmatpush1.bf16.msra.mxu0 %v487
    %521 = vmatprep.subr.bf16.mxu0 %v490
    %522 = vmatpush1.bf16.msra.mxu0 %v489
    %523 = vmatprep.subr.bf16.mxu0 %v492
    %524 = vmatpush1.bf16.msra.mxu0 %v491
    %525 = vmatprep.subr.bf16.mxu0 %v494
    %526 = vmatpush1.bf16.msra.mxu0 %v493
    %527 = vmatprep.subr.bf16.mxu0 %v496
    %528 = vmatpush1.bf16.msra.mxu0 %v495
    %529 = vmatprep.subr.bf16.mxu0 %v498
    %530 = vmatpush1.bf16.msra.mxu0 %v497
    %531 = vmatprep.subr.bf16.mxu0 %v500
    %532 = vmatpush1.bf16.msra.mxu0 %v499
    %533 = vmatprep.subr.bf16.mxu0 %v502
    %534 = vmatpush1.bf16.msra.mxu0 %v501
    %535 = vmatprep.subr.bf16.mxu0 0
    %536 = vmatpush1.bf16.msra.mxu0 0
    %537 = vmatprep.subr.bf16.mxu0 0
    %538 = vmatpush1.bf16.msra.mxu0 0
    %539 = vmatprep.subr.bf16.mxu0 0
    %540 = vmatpush1.bf16.msra.mxu0 0
    %541 = vmatprep.subr.bf16.mxu0 0
    %542 = vmatpush1.bf16.msra.mxu0 0
    %543 = vmatprep.subr.bf16.mxu0 0
    %544 = vmatpush1.bf16.msra.mxu0 0
    %545 = vmatprep.subr.bf16.mxu0 0
    %546 = vmatpush1.bf16.msra.mxu0 0
    %547 = vmatprep.subr.bf16.mxu0 0
    %548 = vmatpush1.bf16.msra.mxu0 0
    %549 = vmatprep.subr.bf16.mxu0 0
    %550 = vmatpush1.bf16.msra.mxu0 0
    %551 = vmatprep.mubr.bf16.mxu0 0
    %552 = vmatmul.mubr.bf16.gmra.mrb[0].mxu0 %v411
    %v553 = vpop.f32.mrb[0].mxu0
    %v554 = vadd.f32 %v432, %v553
    %v555 = vpop.f32.mrb[0].mxu0
    %v556 = vadd.f32 %v436, %v555
    %v557 = vpop.f32.mrb[0].mxu0
    %v558 = vpop.f32.mrb[0].mxu0
    %559 = vdwg.mxu0
    %v560 = vmax.f32 %v554, 0.0
    %v561 = vmax.f32 %v556, 0.0
    %v562 = vpack.c.bf16 %v560, %v560
    %v563 = vpack.c.bf16 %v561, %v561
    %v564 = vld [vmem:[#allocation7] sm:$0xff]
    %v565 = vld [vmem:[#allocation7 + $0x8] sm:$0xff]
    %v566 = vld [vmem:[#allocation7 + $0x10] sm:$0xff]
    %v567 = vld [vmem:[#allocation7 + $0x18] sm:$0xff]
    %v568 = vld [vmem:[#allocation7 + $0x20] sm:$0xff]
    %v569 = vld [vmem:[#allocation7 + $0x28] sm:$0xff]
    %v570 = vld [vmem:[#allocation7 + $0x30] sm:$0xff]
    %v571 = vld [vmem:[#allocation7 + $0x38] sm:$0xff]
    %v572 = vld [vmem:[#allocation7 + $0x40] sm:$0xff]
    %v573 = vld [vmem:[#allocation7 + $0x48] sm:$0xff]
    %v574 = vld [vmem:[#allocation7 + $0x50] sm:$0xff]
    %v575 = vld [vmem:[#allocation7 + $0x58] sm:$0xff]
    %v576 = vld [vmem:[#allocation7 + $0x60] sm:$0xff]
    %v577 = vld [vmem:[#allocation7 + $0x68] sm:$0xff]
    %v578 = vld [vmem:[#allocation7 + $0x70] sm:$0xff]
    %v579 = vld [vmem:[#allocation7 + $0x78] sm:$0xff]
    %v580 = vld [vmem:[#allocation7 + $0x80] sm:$0xff]
    %v581 = vld [vmem:[#allocation7 + $0x88] sm:$0xff]
    %v582 = vld [vmem:[#allocation7 + $0x90] sm:$0xff]
    %v583 = vld [vmem:[#allocation7 + $0x98] sm:$0xff]
    %v584 = vld [vmem:[#allocation7 + $0xa0] sm:$0xff]
    %v585 = vld [vmem:[#allocation7 + $0xa8] sm:$0xff]
    %v586 = vld [vmem:[#allocation7 + $0xb0] sm:$0xff]
    %v587 = vld [vmem:[#allocation7 + $0xb8] sm:$0xff]
    %v588 = vld [vmem:[#allocation7 + $0xc0] sm:$0xff]
    %v589 = vld [vmem:[#allocation7 + $0xc8] sm:$0xff]
    %v590 = vld [vmem:[#allocation7 + $0xd0] sm:$0xff]
    %v591 = vld [vmem:[#allocation7 + $0xd8] sm:$0xff]
    %v592 = vld [vmem:[#allocation7 + $0xe0] sm:$0xff]
    %v593 = vld [vmem:[#allocation7 + $0xe8] sm:$0xff]
    %v594 = vld [vmem:[#allocation7 + $0xf0] sm:$0xff]
    %v595 = vld [vmem:[#allocation7 + $0xf8] sm:$0xff]
    %v596 = vld [vmem:[#allocation7 + $0x100] sm:$0xff]
    %v597 = vld [vmem:[#allocation7 + $0x108] sm:$0xff]
    %v598 = vld [vmem:[#allocation7 + $0x110] sm:$0xff]
    %v599 = vld [vmem:[#allocation7 + $0x118] sm:$0xff]
    %v600 = vld [vmem:[#allocation7 + $0x120] sm:$0xff]
    %v601 = vld [vmem:[#allocation7 + $0x128] sm:$0xff]
    %v602 = vld [vmem:[#allocation7 + $0x130] sm:$0xff]
    %v603 = vld [vmem:[#allocation7 + $0x138] sm:$0xff]
    %v604 = vld [vmem:[#allocation7 + $0x140] sm:$0xff]
    %v605 = vld [vmem:[#allocation7 + $0x148] sm:$0xff]
    %v606 = vld [vmem:[#allocation7 + $0x150] sm:$0xff]
    %v607 = vld [vmem:[#allocation7 + $0x158] sm:$0xff]
    %v608 = vld [vmem:[#allocation7 + $0x160] sm:$0xff]
    %v609 = vld [vmem:[#allocation7 + $0x168] sm:$0xff]
    %v610 = vld [vmem:[#allocation7 + $0x170] sm:$0xff]
    %v611 = vld [vmem:[#allocation7 + $0x178] sm:$0xff]
    %v612 = vld [vmem:[#allocation7 + $0x180] sm:$0xff]
    %v613 = vld [vmem:[#allocation7 + $0x188] sm:$0xff]
    %v614 = vld [vmem:[#allocation7 + $0x190] sm:$0xff]
    %v615 = vld [vmem:[#allocation7 + $0x198] sm:$0xff]
    %v616 = vld [vmem:[#allocation7 + $0x1a0] sm:$0xff]
    %v617 = vld [vmem:[#allocation7 + $0x1a8] sm:$0xff]
    %v618 = vld [vmem:[#allocation7 + $0x1b0] sm:$0xff]
    %v619 = vld [vmem:[#allocation7 + $0x1b8] sm:$0xff]
    %v620 = vld [vmem:[#allocation7 + $0x1c0] sm:$0xff]
    %v621 = vld [vmem:[#allocation7 + $0x1c8] sm:$0xff]
    %v622 = vld [vmem:[#allocation7 + $0x1d0] sm:$0xff]
    %v623 = vld [vmem:[#allocation7 + $0x1d8] sm:$0xff]
    %v624 = vld [vmem:[#allocation7 + $0x1e0] sm:$0xff]
    %v625 = vld [vmem:[#allocation7 + $0x1e8] sm:$0xff]
    %v626 = vld [vmem:[#allocation7 + $0x1f0] sm:$0xff]
    %v627 = vld [vmem:[#allocation7 + $0x1f8] sm:$0xff]
    %v628 = vld [vmem:[#allocation7 + $0x200] sm:$0xff]
    %v629 = vld [vmem:[#allocation7 + $0x208] sm:$0xff]
    %v630 = vld [vmem:[#allocation7 + $0x210] sm:$0xff]
    %v631 = vld [vmem:[#allocation7 + $0x218] sm:$0xff]
    %v632 = vld [vmem:[#allocation7 + $0x220] sm:$0xff]
    %v633 = vld [vmem:[#allocation7 + $0x228] sm:$0xff]
    %v634 = vld [vmem:[#allocation7 + $0x230] sm:$0xff]
    %v635 = vld [vmem:[#allocation7 + $0x238] sm:$0xff]
    %v636 = vld [vmem:[#allocation7 + $0x240] sm:$0xff]
    %v637 = vld [vmem:[#allocation7 + $0x248] sm:$0xff]
    %v638 = vld [vmem:[#allocation7 + $0x250] sm:$0xff]
    %v639 = vld [vmem:[#allocation7 + $0x258] sm:$0xff]
    %v640 = vld [vmem:[#allocation7 + $0x260] sm:$0xff]
    %v641 = vld [vmem:[#allocation7 + $0x268] sm:$0xff]
    %v642 = vld [vmem:[#allocation7 + $0x270] sm:$0xff]
    %v643 = vld [vmem:[#allocation7 + $0x278] sm:$0xff]
    %v644 = vld [vmem:[#allocation7 + $0x280] sm:$0xff]
    %v645 = vld [vmem:[#allocation7 + $0x288] sm:$0xff]
    %v646 = vld [vmem:[#allocation7 + $0x290] sm:$0xff]
    %v647 = vld [vmem:[#allocation7 + $0x298] sm:$0xff]
    %v648 = vld [vmem:[#allocation7 + $0x2a0] sm:$0xff]
    %v649 = vld [vmem:[#allocation7 + $0x2a8] sm:$0xff]
    %v650 = vld [vmem:[#allocation7 + $0x2b0] sm:$0xff]
    %v651 = vld [vmem:[#allocation7 + $0x2b8] sm:$0xff]
    %v652 = vld [vmem:[#allocation7 + $0x2c0] sm:$0xff]
    %v653 = vld [vmem:[#allocation7 + $0x2c8] sm:$0xff]
    %v654 = vld [vmem:[#allocation7 + $0x2d0] sm:$0xff]
    %v655 = vld [vmem:[#allocation7 + $0x2d8] sm:$0xff]
    %v656 = vld [vmem:[#allocation7 + $0x2e0] sm:$0xff]
    %v657 = vld [vmem:[#allocation7 + $0x2e8] sm:$0xff]
    %v658 = vld [vmem:[#allocation7 + $0x2f0] sm:$0xff]
    %v659 = vld [vmem:[#allocation7 + $0x2f8] sm:$0xff]
    %v661 = vlaneseq
    %v662 = vshrl.u32 %v661, 7
    %v663 = vsub.s32 0, %v662
    %v664 = vrot.slane %v86, %v663
    %v665 = vlaneseq
    %v666 = vshrl.u32 %v665, 7
    %v667 = vsub.s32 1, %v666
    %v668 = vrot.slane %v86, %v667
    %v669 = vlaneseq
    %v670 = vshrl.u32 %v669, 7
    %v671 = vsub.s32 2, %v670
    %v672 = vrot.slane %v86, %v671
    %v673 = vlaneseq
    %v674 = vshrl.u32 %v673, 7
    %v675 = vsub.s32 3, %v674
    %v676 = vrot.slane %v86, %v675
    %v677 = vlaneseq
    %v678 = vshrl.u32 %v677, 7
    %v679 = vsub.s32 4, %v678
    %v680 = vrot.slane %v86, %v679
    %v681 = vlaneseq
    %v682 = vshrl.u32 %v681, 7
    %v683 = vsub.s32 5, %v682
    %v684 = vrot.slane %v86, %v683
    %v787 = vunpack.c.l.b16 %v564
    %v788 = vunpack.c.h.b16 %v564
    %v789 = vunpack.c.l.b16 %v565
    %v790 = vunpack.c.h.b16 %v565
    %v791 = vunpack.c.l.b16 %v566
    %v792 = vunpack.c.h.b16 %v566
    %v793 = vunpack.c.l.b16 %v567
    %v794 = vunpack.c.h.b16 %v567
    %v795 = vunpack.c.l.b16 %v568
    %v796 = vunpack.c.h.b16 %v568
    %v797 = vunpack.c.l.b16 %v569
    %v798 = vunpack.c.h.b16 %v569
    %v799 = vunpack.c.l.b16 %v570
    %v800 = vunpack.c.h.b16 %v570
    %v801 = vunpack.c.l.b16 %v571
    %v802 = vunpack.c.h.b16 %v571
    %v803 = vunpack.c.l.b16 %v572
    %v804 = vunpack.c.h.b16 %v572
    %v805 = vunpack.c.l.b16 %v573
    %v806 = vunpack.c.h.b16 %v573
    %v807 = vunpack.c.l.b16 %v574
    %v808 = vunpack.c.h.b16 %v574
    %v809 = vunpack.c.l.b16 %v575
    %v810 = vunpack.c.h.b16 %v575
    %v811 = vunpack.c.l.b16 %v576
    %v812 = vunpack.c.h.b16 %v576
    %v813 = vunpack.c.l.b16 %v577
    %v814 = vunpack.c.h.b16 %v577
    %v815 = vunpack.c.l.b16 %v578
    %v816 = vunpack.c.h.b16 %v578
    %v817 = vunpack.c.l.b16 %v579
    %v818 = vunpack.c.h.b16 %v579
    %v819 = vunpack.c.l.b16 %v580
    %v820 = vunpack.c.h.b16 %v580
    %v821 = vunpack.c.l.b16 %v581
    %v822 = vunpack.c.h.b16 %v581
    %v823 = vunpack.c.l.b16 %v582
    %v824 = vunpack.c.h.b16 %v582
    %v825 = vunpack.c.l.b16 %v583
    %v826 = vunpack.c.h.b16 %v583
    %v827 = vunpack.c.l.b16 %v584
    %v828 = vunpack.c.h.b16 %v584
    %v829 = vunpack.c.l.b16 %v585
    %v830 = vunpack.c.h.b16 %v585
    %v831 = vunpack.c.l.b16 %v586
    %v832 = vunpack.c.h.b16 %v586
    %v833 = vunpack.c.l.b16 %v587
    %v834 = vunpack.c.h.b16 %v587
    %v835 = vunpack.c.l.b16 %v588
    %v836 = vunpack.c.h.b16 %v588
    %v837 = vunpack.c.l.b16 %v589
    %v838 = vunpack.c.h.b16 %v589
    %v839 = vunpack.c.l.b16 %v590
    %v840 = vunpack.c.h.b16 %v590
    %v841 = vunpack.c.l.b16 %v591
    %v842 = vunpack.c.h.b16 %v591
    %v843 = vunpack.c.l.b16 %v592
    %v844 = vunpack.c.h.b16 %v592
    %v845 = vunpack.c.l.b16 %v593
    %v846 = vunpack.c.h.b16 %v593
    %v847 = vunpack.c.l.b16 %v594
    %v848 = vunpack.c.h.b16 %v594
    %v849 = vunpack.c.l.b16 %v595
    %v850 = vunpack.c.h.b16 %v595
    %v851 = vunpack.c.l.b16 %v596
    %v852 = vunpack.c.h.b16 %v596
    %v853 = vunpack.c.l.b16 %v597
    %v854 = vunpack.c.h.b16 %v597
    %v855 = vunpack.c.l.b16 %v598
    %v856 = vunpack.c.h.b16 %v598
    %v857 = vunpack.c.l.b16 %v599
    %v858 = vunpack.c.h.b16 %v599
    %v859 = vunpack.c.l.b16 %v600
    %v860 = vunpack.c.h.b16 %v600
    %v861 = vunpack.c.l.b16 %v601
    %v862 = vunpack.c.h.b16 %v601
    %v863 = vunpack.c.l.b16 %v602
    %v864 = vunpack.c.h.b16 %v602
    %v865 = vunpack.c.l.b16 %v603
    %v866 = vunpack.c.h.b16 %v603
    %v867 = vunpack.c.l.b16 %v604
    %v868 = vunpack.c.h.b16 %v604
    %v869 = vunpack.c.l.b16 %v605
    %v870 = vunpack.c.h.b16 %v605
    %v871 = vunpack.c.l.b16 %v606
    %v872 = vunpack.c.h.b16 %v606
    %v873 = vunpack.c.l.b16 %v607
    %v874 = vunpack.c.h.b16 %v607
    %v875 = vunpack.c.l.b16 %v608
    %v876 = vunpack.c.h.b16 %v608
    %v877 = vunpack.c.l.b16 %v609
    %v878 = vunpack.c.h.b16 %v609
    %v879 = vunpack.c.l.b16 %v610
    %v880 = vunpack.c.h.b16 %v610
    %v881 = vunpack.c.l.b16 %v611
    %v882 = vunpack.c.h.b16 %v611
    %v883 = vunpack.c.l.b16 %v612
    %v884 = vunpack.c.h.b16 %v612
    %v885 = vunpack.c.l.b16 %v613
    %v886 = vunpack.c.h.b16 %v613
    %v887 = vunpack.c.l.b16 %v614
    %v888 = vunpack.c.h.b16 %v614
    %v889 = vunpack.c.l.b16 %v615
    %v890 = vunpack.c.h.b16 %v615
    %v891 = vunpack.c.l.b16 %v616
    %v892 = vunpack.c.h.b16 %v616
    %v893 = vunpack.c.l.b16 %v617
    %v894 = vunpack.c.h.b16 %v617
    %v895 = vunpack.c.l.b16 %v618
    %v896 = vunpack.c.h.b16 %v618
    %v897 = vunpack.c.l.b16 %v619
    %v898 = vunpack.c.h.b16 %v619
    %v899 = vunpack.c.l.b16 %v620
    %v900 = vunpack.c.h.b16 %v620
    %v901 = vunpack.c.l.b16 %v621
    %v902 = vunpack.c.h.b16 %v621
    %v903 = vunpack.c.l.b16 %v622
    %v904 = vunpack.c.h.b16 %v622
    %v905 = vunpack.c.l.b16 %v623
    %v906 = vunpack.c.h.b16 %v623
    %v907 = vunpack.c.l.b16 %v624
    %v908 = vunpack.c.h.b16 %v624
    %v909 = vunpack.c.l.b16 %v625
    %v910 = vunpack.c.h.b16 %v625
    %v911 = vunpack.c.l.b16 %v626
    %v912 = vunpack.c.h.b16 %v626
    %v913 = vunpack.c.l.b16 %v627
    %v914 = vunpack.c.h.b16 %v627
    %v915 = vunpack.c.l.b16 %v628
    %v916 = vunpack.c.h.b16 %v628
    %v917 = vunpack.c.l.b16 %v629
    %v918 = vunpack.c.h.b16 %v629
    %v919 = vunpack.c.l.b16 %v630
    %v920 = vunpack.c.h.b16 %v630
    %v921 = vunpack.c.l.b16 %v631
    %v922 = vunpack.c.h.b16 %v631
    %v923 = vunpack.c.l.b16 %v632
    %v924 = vunpack.c.h.b16 %v632
    %v925 = vunpack.c.l.b16 %v633
    %v926 = vunpack.c.h.b16 %v633
    %v927 = vunpack.c.l.b16 %v634
    %v928 = vunpack.c.h.b16 %v634
    %v929 = vunpack.c.l.b16 %v635
    %v930 = vunpack.c.h.b16 %v635
    %v931 = vunpack.c.l.b16 %v636
    %v932 = vunpack.c.h.b16 %v636
    %v933 = vunpack.c.l.b16 %v637
    %v934 = vunpack.c.h.b16 %v637
    %v935 = vunpack.c.l.b16 %v638
    %v936 = vunpack.c.h.b16 %v638
    %v937 = vunpack.c.l.b16 %v639
    %v938 = vunpack.c.h.b16 %v639
    %v939 = vunpack.c.l.b16 %v640
    %v940 = vunpack.c.h.b16 %v640
    %v941 = vunpack.c.l.b16 %v641
    %v942 = vunpack.c.h.b16 %v641
    %v943 = vunpack.c.l.b16 %v642
    %v944 = vunpack.c.h.b16 %v642
    %v945 = vunpack.c.l.b16 %v643
    %v946 = vunpack.c.h.b16 %v643
    %v947 = vunpack.c.l.b16 %v644
    %v948 = vunpack.c.h.b16 %v644
    %v949 = vunpack.c.l.b16 %v645
    %v950 = vunpack.c.h.b16 %v645
    %v951 = vunpack.c.l.b16 %v646
    %v952 = vunpack.c.h.b16 %v646
    %v953 = vunpack.c.l.b16 %v647
    %v954 = vunpack.c.h.b16 %v647
    %v955 = vunpack.c.l.b16 %v648
    %v956 = vunpack.c.h.b16 %v648
    %v957 = vunpack.c.l.b16 %v649
    %v958 = vunpack.c.h.b16 %v649
    %v959 = vunpack.c.l.b16 %v650
    %v960 = vunpack.c.h.b16 %v650
    %v961 = vunpack.c.l.b16 %v651
    %v962 = vunpack.c.h.b16 %v651
    %v963 = vunpack.c.l.b16 %v652
    %v964 = vunpack.c.h.b16 %v652
    %v965 = vunpack.c.l.b16 %v653
    %v966 = vunpack.c.h.b16 %v653
    %v967 = vunpack.c.l.b16 %v654
    %v968 = vunpack.c.h.b16 %v654
    %v969 = vunpack.c.l.b16 %v655
    %v970 = vunpack.c.h.b16 %v655
    %v971 = vunpack.c.l.b16 %v656
    %v972 = vunpack.c.h.b16 %v656
    %v973 = vunpack.c.l.b16 %v657
    %v974 = vunpack.c.h.b16 %v657
    %v975 = vunpack.c.l.b16 %v658
    %v976 = vunpack.c.h.b16 %v658
    %v977 = vunpack.c.l.b16 %v659
    %v978 = vunpack.c.h.b16 %v659
    %v979 = vpack.c.b16 %v793, %v787
    %v980 = vpack.c.b16 %v794, %v788
    %v981 = vpack.c.b16 %v795, %v789
    %v982 = vpack.c.b16 %v796, %v790
    %v983 = vpack.c.b16 %v797, %v791
    %v984 = vpack.c.b16 %v798, %v792
    %v985 = vpack.c.b16 %v805, %v799
    %v986 = vpack.c.b16 %v806, %v800
    %v987 = vpack.c.b16 %v807, %v801
    %v988 = vpack.c.b16 %v808, %v802
    %v989 = vpack.c.b16 %v809, %v803
    %v990 = vpack.c.b16 %v810, %v804
    %v991 = vpack.c.b16 %v817, %v811
    %v992 = vpack.c.b16 %v818, %v812
    %v993 = vpack.c.b16 %v819, %v813
    %v994 = vpack.c.b16 %v820, %v814
    %v995 = vpack.c.b16 %v821, %v815
    %v996 = vpack.c.b16 %v822, %v816
    %v997 = vpack.c.b16 %v829, %v823
    %v998 = vpack.c.b16 %v830, %v824
    %v999 = vpack.c.b16 %v831, %v825
    %v1000 = vpack.c.b16 %v832, %v826
    %v1001 = vpack.c.b16 %v833, %v827
    %v1002 = vpack.c.b16 %v834, %v828
    %v1003 = vpack.c.b16 %v841, %v835
    %v1004 = vpack.c.b16 %v842, %v836
    %v1005 = vpack.c.b16 %v843, %v837
    %v1006 = vpack.c.b16 %v844, %v838
    %v1007 = vpack.c.b16 %v845, %v839
    %v1008 = vpack.c.b16 %v846, %v840
    %v1009 = vpack.c.b16 %v853, %v847
    %v1010 = vpack.c.b16 %v854, %v848
    %v1011 = vpack.c.b16 %v855, %v849
    %v1012 = vpack.c.b16 %v856, %v850
    %v1013 = vpack.c.b16 %v857, %v851
    %v1014 = vpack.c.b16 %v858, %v852
    %v1015 = vpack.c.b16 %v865, %v859
    %v1016 = vpack.c.b16 %v866, %v860
    %v1017 = vpack.c.b16 %v867, %v861
    %v1018 = vpack.c.b16 %v868, %v862
    %v1019 = vpack.c.b16 %v869, %v863
    %v1020 = vpack.c.b16 %v870, %v864
    %v1021 = vpack.c.b16 %v877, %v871
    %v1022 = vpack.c.b16 %v878, %v872
    %v1023 = vpack.c.b16 %v879, %v873
    %v1024 = vpack.c.b16 %v880, %v874
    %v1025 = vpack.c.b16 %v881, %v875
    %v1026 = vpack.c.b16 %v882, %v876
    %v1027 = vpack.c.b16 %v889, %v883
    %v1028 = vpack.c.b16 %v890, %v884
    %v1029 = vpack.c.b16 %v891, %v885
    %v1030 = vpack.c.b16 %v892, %v886
    %v1031 = vpack.c.b16 %v893, %v887
    %v1032 = vpack.c.b16 %v894, %v888
    %v1033 = vpack.c.b16 %v901, %v895
    %v1034 = vpack.c.b16 %v902, %v896
    %v1035 = vpack.c.b16 %v903, %v897
    %v1036 = vpack.c.b16 %v904, %v898
    %v1037 = vpack.c.b16 %v905, %v899
    %v1038 = vpack.c.b16 %v906, %v900
    %v1039 = vpack.c.b16 %v913, %v907
    %v1040 = vpack.c.b16 %v914, %v908
    %v1041 = vpack.c.b16 %v915, %v909
    %v1042 = vpack.c.b16 %v916, %v910
    %v1043 = vpack.c.b16 %v917, %v911
    %v1044 = vpack.c.b16 %v918, %v912
    %v1045 = vpack.c.b16 %v925, %v919
    %v1046 = vpack.c.b16 %v926, %v920
    %v1047 = vpack.c.b16 %v927, %v921
    %v1048 = vpack.c.b16 %v928, %v922
    %v1049 = vpack.c.b16 %v929, %v923
    %v1050 = vpack.c.b16 %v930, %v924
    %v1051 = vpack.c.b16 %v937, %v931
    %v1052 = vpack.c.b16 %v938, %v932
    %v1053 = vpack.c.b16 %v939, %v933
    %v1054 = vpack.c.b16 %v940, %v934
    %v1055 = vpack.c.b16 %v941, %v935
    %v1056 = vpack.c.b16 %v942, %v936
    %v1057 = vpack.c.b16 %v949, %v943
    %v1058 = vpack.c.b16 %v950, %v944
    %v1059 = vpack.c.b16 %v951, %v945
    %v1060 = vpack.c.b16 %v952, %v946
    %v1061 = vpack.c.b16 %v953, %v947
    %v1062 = vpack.c.b16 %v954, %v948
    %v1063 = vpack.c.b16 %v961, %v955
    %v1064 = vpack.c.b16 %v962, %v956
    %v1065 = vpack.c.b16 %v963, %v957
    %v1066 = vpack.c.b16 %v964, %v958
    %v1067 = vpack.c.b16 %v965, %v959
    %v1068 = vpack.c.b16 %v966, %v960
    %v1069 = vpack.c.b16 %v973, %v967
    %v1070 = vpack.c.b16 %v974, %v968
    %v1071 = vpack.c.b16 %v975, %v969
    %v1072 = vpack.c.b16 %v976, %v970
    %v1073 = vpack.c.b16 %v977, %v971
    %v1074 = vpack.c.b16 %v978, %v972
    %1171 = vmatprep.subr.bf16.mxu0 %v980
    %1172 = vmatpush1.bf16.msra.mxu0 %v979
    %1173 = vmatprep.subr.bf16.mxu0 %v986
    %1174 = vmatpush1.bf16.msra.mxu0 %v985
    %1175 = vmatprep.subr.bf16.mxu0 %v992
    %1176 = vmatpush1.bf16.msra.mxu0 %v991
    %1177 = vmatprep.subr.bf16.mxu0 %v998
    %1178 = vmatpush1.bf16.msra.mxu0 %v997
    %1179 = vmatprep.subr.bf16.mxu0 %v1004
    %1180 = vmatpush1.bf16.msra.mxu0 %v1003
    %1181 = vmatprep.subr.bf16.mxu0 %v1010
    %1182 = vmatpush1.bf16.msra.mxu0 %v1009
    %1183 = vmatprep.subr.bf16.mxu0 %v1016
    %1184 = vmatpush1.bf16.msra.mxu0 %v1015
    %1185 = vmatprep.subr.bf16.mxu0 %v1022
    %1186 = vmatpush1.bf16.msra.mxu0 %v1021
    %1187 = vmatprep.subr.bf16.mxu0 %v1028
    %1188 = vmatpush1.bf16.msra.mxu0 %v1027
    %1189 = vmatprep.subr.bf16.mxu0 %v1034
    %1190 = vmatpush1.bf16.msra.mxu0 %v1033
    %1191 = vmatprep.subr.bf16.mxu0 %v1040
    %1192 = vmatpush1.bf16.msra.mxu0 %v1039
    %1193 = vmatprep.subr.bf16.mxu0 %v1046
    %1194 = vmatpush1.bf16.msra.mxu0 %v1045
    %1195 = vmatprep.subr.bf16.mxu0 %v1052
    %1196 = vmatpush1.bf16.msra.mxu0 %v1051
    %1197 = vmatprep.subr.bf16.mxu0 %v1058
    %1198 = vmatpush1.bf16.msra.mxu0 %v1057
    %1199 = vmatprep.subr.bf16.mxu0 %v1064
    %1200 = vmatpush1.bf16.msra.mxu0 %v1063
    %1201 = vmatprep.subr.bf16.mxu0 %v1070
    %1202 = vmatpush1.bf16.msra.mxu0 %v1069
    %1203 = vmatprep.mubr.bf16.mxu0 %v563
    %1204 = vmatmul.mubr.bf16.gmra.mrb[0].mxu0 %v562
    %v1205 = vpop.f32.mrb[0].mxu0
    %v1206 = vadd.f32 %v664, %v1205
    %v1207 = vpop.f32.mrb[0].mxu0
    %v1208 = vadd.f32 %v668, %v1207
    %v1209 = vpop.f32.mrb[0].mxu0
    %v1210 = vpop.f32.mrb[0].mxu0
    %1211 = vdwg.mxu0
    %1212 = vmatprep.subr.bf16.mxu0 %v982
    %1213 = vmatpush1.bf16.msra.mxu0 %v981
    %1214 = vmatprep.subr.bf16.mxu0 %v988
    %1215 = vmatpush1.bf16.msra.mxu0 %v987
    %1216 = vmatprep.subr.bf16.mxu0 %v994
    %1217 = vmatpush1.bf16.msra.mxu0 %v993
    %1218 = vmatprep.subr.bf16.mxu0 %v1000
    %1219 = vmatpush1.bf16.msra.mxu0 %v999
    %1220 = vmatprep.subr.bf16.mxu0 %v1006
    %1221 = vmatpush1.bf16.msra.mxu0 %v1005
    %1222 = vmatprep.subr.bf16.mxu0 %v1012
    %1223 = vmatpush1.bf16.msra.mxu0 %v1011
    %1224 = vmatprep.subr.bf16.mxu0 %v1018
    %1225 = vmatpush1.bf16.msra.mxu0 %v1017
    %1226 = vmatprep.subr.bf16.mxu0 %v1024
    %1227 = vmatpush1.bf16.msra.mxu0 %v1023
    %1228 = vmatprep.subr.bf16.mxu0 %v1030
    %1229 = vmatpush1.bf16.msra.mxu0 %v1029
    %1230 = vmatprep.subr.bf16.mxu0 %v1036
    %1231 = vmatpush1.bf16.msra.mxu0 %v1035
    %1232 = vmatprep.subr.bf16.mxu0 %v1042
    %1233 = vmatpush1.bf16.msra.mxu0 %v1041
    %1234 = vmatprep.subr.bf16.mxu0 %v1048
    %1235 = vmatpush1.bf16.msra.mxu0 %v1047
    %1236 = vmatprep.subr.bf16.mxu0 %v1054
    %1237 = vmatpush1.bf16.msra.mxu0 %v1053
    %1238 = vmatprep.subr.bf16.mxu0 %v1060
    %1239 = vmatpush1.bf16.msra.mxu0 %v1059
    %1240 = vmatprep.subr.bf16.mxu0 %v1066
    %1241 = vmatpush1.bf16.msra.mxu0 %v1065
    %1242 = vmatprep.subr.bf16.mxu0 %v1072
    %1243 = vmatpush1.bf16.msra.mxu0 %v1071
    %1244 = vmatprep.mubr.bf16.mxu0 %v563
    %1245 = vmatmul.mubr.bf16.gmra.mrb[0].mxu0 %v562
    %v1246 = vpop.f32.mrb[0].mxu0
    %v1247 = vadd.f32 %v672, %v1246
    %v1248 = vpop.f32.mrb[0].mxu0
    %v1249 = vadd.f32 %v676, %v1248
    %v1250 = vpop.f32.mrb[0].mxu0
    %v1251 = vpop.f32.mrb[0].mxu0
    %1252 = vdwg.mxu0
    %1253 = vmatprep.subr.bf16.mxu0 %v984
    %1254 = vmatpush1.bf16.msra.mxu0 %v983
    %1255 = vmatprep.subr.bf16.mxu0 %v990
    %1256 = vmatpush1.bf16.msra.mxu0 %v989
    %1257 = vmatprep.subr.bf16.mxu0 %v996
    %1258 = vmatpush1.bf16.msra.mxu0 %v995
    %1259 = vmatprep.subr.bf16.mxu0 %v1002
    %1260 = vmatpush1.bf16.msra.mxu0 %v1001
    %1261 = vmatprep.subr.bf16.mxu0 %v1008
    %1262 = vmatpush1.bf16.msra.mxu0 %v1007
    %1263 = vmatprep.subr.bf16.mxu0 %v1014
    %1264 = vmatpush1.bf16.msra.mxu0 %v1013
    %1265 = vmatprep.subr.bf16.mxu0 %v1020
    %1266 = vmatpush1.bf16.msra.mxu0 %v1019
    %1267 = vmatprep.subr.bf16.mxu0 %v1026
    %1268 = vmatpush1.bf16.msra.mxu0 %v1025
    %1269 = vmatprep.subr.bf16.mxu0 %v1032
    %1270 = vmatpush1.bf16.msra.mxu0 %v1031
    %1271 = vmatprep.subr.bf16.mxu0 %v1038
    %1272 = vmatpush1.bf16.msra.mxu0 %v1037
    %1273 = vmatprep.subr.bf16.mxu0 %v1044
    %1274 = vmatpush1.bf16.msra.mxu0 %v1043
    %1275 = vmatprep.subr.bf16.mxu0 %v1050
    %1276 = vmatpush1.bf16.msra.mxu0 %v1049
    %1277 = vmatprep.subr.bf16.mxu0 %v1056
    %1278 = vmatpush1.bf16.msra.mxu0 %v1055
    %1279 = vmatprep.subr.bf16.mxu0 %v1062
    %1280 = vmatpush1.bf16.msra.mxu0 %v1061
    %1281 = vmatprep.subr.bf16.mxu0 %v1068
    %1282 = vmatpush1.bf16.msra.mxu0 %v1067
    %1283 = vmatprep.subr.bf16.mxu0 %v1074
    %1284 = vmatpush1.bf16.msra.mxu0 %v1073
    %1285 = vmatprep.mubr.bf16.mxu0 %v563
    %1286 = vmatmul.mubr.bf16.gmra.mrb[0].mxu0 %v562
    %v1287 = vpop.f32.mrb[0].mxu0
    %v1288 = vadd.f32 %v680, %v1287
    %v1289 = vpop.f32.mrb[0].mxu0
    %v1290 = vadd.f32 %v684, %v1289
    %v1291 = vpop.f32.mrb[0].mxu0
    %v1292 = vpop.f32.mrb[0].mxu0
    %1293 = vdwg.mxu0
    %v1294 = vpack.c.bf16 %v1206, %v1206
    %v1295 = vpack.c.bf16 %v1208, %v1208
    %v1296 = vpack.c.bf16 %v1247, %v1247
    %v1297 = vpack.c.bf16 %v1249, %v1249
    %v1298 = vpack.c.bf16 %v1288, %v1288
    %v1299 = vpack.c.bf16 %v1290, %v1290
    %v1300 = vxor.u32 %v1294, 2147516416
    %v1301 = vxor.u32 %v1295, 2147516416
    %v1302 = vxor.u32 %v1296, 2147516416
    %v1303 = vxor.u32 %v1297, 2147516416
    %v1304 = vxor.u32 %v1298, 2147516416
    %v1305 = vxor.u32 %v1299, 2147516416
    %v1307 = vmul.bf16 %v1300, 1069105081
    %v1308 = vpow.bf16.pop %v1307
    %v1310 = vmul.bf16 %v1301, 1069105081
    %v1311 = vpow.bf16.pop %v1310
    %v1313 = vmul.bf16 %v1302, 1069105081
    %v1314 = vpow.bf16.pop %v1313
    %v1316 = vmul.bf16 %v1303, 1069105081
    %v1317 = vpow.bf16.pop %v1316
    %v1319 = vmul.bf16 %v1304, 1069105081
    %v1320 = vpow.bf16.pop %v1319
    %v1322 = vmul.bf16 %v1305, 1069105081
    %v1323 = vpow.bf16.pop %v1322
    %v1324 = vadd.bf16 %v1308, 1065369472
    %v1325 = vadd.bf16 %v1311, 1065369472
    %v1326 = vadd.bf16 %v1314, 1065369472
    %v1327 = vadd.bf16 %v1317, 1065369472
    %v1328 = vadd.bf16 %v1320, 1065369472
    %v1329 = vadd.bf16 %v1323, 1065369472
    %v1330 = vrcp.bf16.pop %v1324
    %v1331 = vmul.bf16 1065369472, %v1330
    %v1332 = vrcp.bf16.pop %v1325
    %v1333 = vmul.bf16 1065369472, %v1332
    %v1334 = vrcp.bf16.pop %v1326
    %v1335 = vmul.bf16 1065369472, %v1334
    %v1336 = vrcp.bf16.pop %v1327
    %v1337 = vmul.bf16 1065369472, %v1336
    %v1338 = vrcp.bf16.pop %v1328
    %v1339 = vmul.bf16 1065369472, %v1338
    %v1340 = vrcp.bf16.pop %v1329
    %v1341 = vmul.bf16 1065369472, %v1340
    %v1348 = vunpack.c.l.b16 %v1331
    %v1349 = vunpack.c.l.b16 %v1333
    %v1350 = vunpack.c.l.b16 %v1335
    %v1351 = vunpack.c.l.b16 %v1337
    %v1352 = vunpack.c.l.b16 %v1339
    %v1353 = vunpack.c.l.b16 %v1341
    %v1354 = vpack.c.b16 %v1349, %v1348
    %v1355 = vpack.c.b16 %v1351, %v1350
    %v1356 = vpack.c.b16 %v1353, %v1352
    %1360 = vst [vmem:[%s7] sm:$0xff] %v1354
    %1361 = vst [vmem:[%s7 + $0x8] sm:$0xff] %v1355
    %1362 = vst [vmem:[%s7 + $0x10] sm:$0xff] %v1356
    // Predicated region
    $region46: #{mask_decoder_forward.1} parent=1 // pred_check
      _
    $region47: #{mask_decoder_forward.1} parent=1 // pred_check_branch
      %1364 = sbr.rel (0) target = $region49
    $region48: #{mask_decoder_forward.1} parent=1 // pred_region
      _
    $region49: #{mask_decoder_forward.1} parent=1 // pred_fallthru
      _
    // Predicated region
    $region50: #{mask_decoder_forward.1} parent=1 // pred_check
      _
    $region51: #{mask_decoder_forward.1} parent=1 // pred_check_branch
      %1366 = sbr.rel (0) target = $region53
    $region52: #{mask_decoder_forward.1} parent=1 // pred_region
      _
    $region53: #{mask_decoder_forward.1} parent=1 // pred_fallthru
      _
    %1367 = vsyncpa [#allocation3], 1
    %1368 = vsyncpa [#allocation5], 1
    %1369 = vsyncpa [#allocation8], 1

</llo_original>
